<compile_context>
chip_gen: v7x
topology: tpu7x:2x2x1
jax: 0.10.0
libtpu: 0.0.40
codegen_flags: <defaults>
</compile_context>

<pallas_src>
import jax
import jax.numpy as jnp
from jax import lax
from jax.experimental import pallas as pl
from jax.experimental.pallas import tpu as pltpu


def _linear_kernel(x_ref, w_ref, b_ref, o_ref):
    """One (tm, tn) output tile; grid axis 2 is the K reduction (resident o_ref)."""
    k = pl.program_id(2)

    @pl.when(k == 0)
    def _init():
        # Initialize the accumulator with the bias (broadcast over rows):
        # bias applied exactly once per output tile, no finalize add needed.
        o_ref[...] = jnp.broadcast_to(b_ref[...].astype(jnp.float32), o_ref.shape)

    # Per-tile cast to f32 (matches the module's `.float()`; exact for bf16,
    # no-op for f32) — keeps HBM traffic in the input's native dtype.
    x = x_ref[...].astype(jnp.float32)   # [tm, tk]
    w = w_ref[...].astype(jnp.float32)   # [tn, tk]  (native nn.Linear layout)

    # Contract on K with the weight kept in [N, K] layout; HIGHEST precision
    # forces a true f32 matmul (multi-pass on the bf16 MXU) to preserve the
    # .float() reference semantics.
    o_ref[...] += lax.dot_general(
        x, w,
        dimension_numbers=(((1,), (1,)), ((), ())),
        preferred_element_type=jnp.float32,
        precision=lax.Precision.HIGHEST,
    )


def _round_up(x: int, m: int) -> int:
    return (x + m - 1) // m * m


def linear_forward(x, weight, bias, *, tm=512, tn=512, tk=1024):
    """Equivalent of the PyTorch module's forward: (x.float()) @ weight.T + bias.

    x:      [..., input_dim]   (any float dtype; cast to f32 inside the kernel)
    weight: [output_dim, input_dim]   (native nn.Linear layout, NOT pre-transposed)
    bias:   [output_dim]
    returns [..., output_dim] float32
    """
    x = jnp.asarray(x)
    weight = jnp.asarray(weight)
    bias = jnp.asarray(bias)

    # nn.Linear applies over the last axis; flatten leading dims.
    lead_shape = x.shape[:-1]
    K = x.shape[-1]
    N = weight.shape[0]
    x2 = x.reshape(-1, K)
    B = x2.shape[0]

    # Hardware-friendly problem sizes: sublane multiples of 8, lane multiples of 128.
    B8 = _round_up(max(B, 1), 8)
    N128 = _round_up(N, 128)
    K128 = _round_up(K, 128)

    # Tile clamping:
    #  - modest batch: a single M block so the weight streams from HBM once
    #    (this layer is typically weight-bandwidth bound at small batch);
    #  - otherwise cap tm at the default and let M tile.
    tm = B8 if B8 <= 512 else min(tm, B8)
    tn = min(tn, N128)
    tk = min(tk, K128)

    # If M collapsed to one block, try to keep >=2 blocks on the N (parallel)
    # axis so both v7x TensorCores get work (harmless no-op on v5e/v6e).
    if B8 <= tm and N128 // tn <= 1 and N128 >= 256:
        tn = max(128, (N128 // 2) // 128 * 128)

    Bp = _round_up(B, tm)
    Np = _round_up(N, tn)
    Kp = _round_up(K, tk)

    # Zero-pad only when a dim doesn't already divide its tile.  Zero K-padding
    # contributes nothing to the contraction; padded rows/cols are sliced off.
    if (Bp, Kp) != (B, K):
        x2 = jnp.pad(x2, ((0, Bp - B), (0, Kp - K)))
    if (Np, Kp) != (N, K):
        weight = jnp.pad(weight, ((0, Np - N), (0, Kp - K)))
    b2 = bias.reshape(1, N)
    if Np != N:
        b2 = jnp.pad(b2, ((0, 0), (0, Np - N)))

    grid = (Bp // tm, Np // tn, Kp // tk)

    out = pl.pallas_call(
        _linear_kernel,
        out_shape=jax.ShapeDtypeStruct((Bp, Np), jnp.float32),
        grid=grid,
        in_specs=[
            pl.BlockSpec((tm, tk), lambda i, j, k: (i, k)),   # x tile
            pl.BlockSpec((tn, tk), lambda i, j, k: (j, k)),   # W tile ([N, K] layout)
            pl.BlockSpec((1, tn), lambda i, j, k: (0, j)),    # bias tile
        ],
        # Output block index is constant along k -> VMEM-resident accumulator.
        out_specs=pl.BlockSpec((tm, tn), lambda i, j, k: (i, j)),
        compiler_params=pltpu.CompilerParams(
            dimension_semantics=("parallel", "parallel", "arbitrary"),
        ),
    )(x2, weight, b2)

    return out[:B, :N].reshape(*lead_shape, N)


if __name__ == "__main__":
    key = jax.random.PRNGKey(0)
    kx, kw, kb, kx2, kw2, kb2, kx3 = jax.random.split(key, 7)

    # --- Small shapes consistent with the module: batch=8, input_dim=32, output_dim=16
    batch, input_dim, output_dim = 8, 32, 16
    bound = 1.0 / (input_dim ** 0.5)
    weight = jax.random.uniform(kw, (output_dim, input_dim),
                                minval=-bound, maxval=bound, dtype=jnp.float32)
    bias = jax.random.uniform(kb, (output_dim,),
                              minval=-bound, maxval=bound, dtype=jnp.float32)
    x = jax.random.normal(kx, (batch, input_dim), dtype=jnp.float32)

    y = linear_forward(x, weight, bias)
    jax.block_until_ready(y)
    y_ref = jnp.matmul(x, weight.T, precision=lax.Precision.HIGHEST) + bias
    assert y.shape == (batch, output_dim)
    assert jnp.allclose(y, y_ref, atol=1e-5, rtol=1e-5)

    # --- bf16 input with extra leading dims (module does .float(); cast happens in-kernel).
    x3 = jax.random.normal(kx3, (2, 5, input_dim), dtype=jnp.bfloat16)
    y3 = linear_forward(x3, weight, bias)
    jax.block_until_ready(y3)
    y3_ref = jnp.matmul(x3.astype(jnp.float32), weight.T,
                        precision=lax.Precision.HIGHEST) + bias
    assert y3.shape == (2, 5, output_dim) and y3.dtype == jnp.float32
    assert jnp.allclose(y3, y3_ref, atol=1e-5, rtol=1e-5)

    # --- Larger (still cheap) check exercising multi-block K reduction and N tiling:
    #     grid = (1, 2, 2) with the default tn=512, tk=1024.
    B2, K2, N2 = 48, 2048, 1024
    bound2 = 1.0 / (K2 ** 0.5)
    weight2 = jax.random.uniform(kw2, (N2, K2), minval=-bound2, maxval=bound2,
                                 dtype=jnp.float32)
    bias2 = jax.random.uniform(kb2, (N2,), minval=-bound2, maxval=bound2,
                               dtype=jnp.float32)
    x2 = jax.random.normal(kx2, (B2, K2), dtype=jnp.float32)

    y2 = linear_forward(x2, weight2, bias2)
    jax.block_until_ready(y2)
    y2_ref = jnp.matmul(x2, weight2.T, precision=lax.Precision.HIGHEST) + bias2
    assert y2.shape == (B2, N2)
    assert jnp.allclose(y2, y2_ref, atol=1e-4, rtol=1e-4)

    print("KERNEL_OK")
</pallas_src>

<mosaic_0001>
module attributes {stable_mosaic.version = 11 : i64} {
  func.func @_linear_kernel(%arg0: i32, %arg1: i32, %arg2: i32, %arg3: memref<8x128xf32, #tpu.memory_space<vmem>>, %arg4: memref<128x128xf32, #tpu.memory_space<vmem>>, %arg5: memref<1x128xf32, #tpu.memory_space<vmem>>, %arg6: memref<8x128xf32, #tpu.memory_space<vmem>>) attributes {dimension_semantics = [#tpu.dimension_semantics<parallel>, #tpu.dimension_semantics<parallel>, #tpu.dimension_semantics<arbitrary>], iteration_bounds = array<i64: 1, 1, 1>, scalar_prefetch = 0 : i64, scratch_operands = 0 : i64, tpu.core_type = #tpu.core_type<tc>, window_params = [{transform_indices = @transform_0, window_bounds = array<i64: 8, 128>}, {transform_indices = @transform_1, window_bounds = array<i64: 128, 128>}, {transform_indices = @transform_2, window_bounds = array<i64: 1, 128>}, {transform_indices = @transform_3, window_bounds = array<i64: 8, 128>}]} {
    %c0_i32 = arith.constant 0 : i32
    %0 = arith.cmpi eq, %arg2, %c0_i32 : i32
    %1 = arith.extui %0 : i1 to i32
    %c0_i32_0 = arith.constant 0 : i32
    %2 = arith.cmpi ne, %1, %c0_i32_0 : i32
    scf.if %2 {
      %c0_8 = arith.constant 0 : index
      %c0_9 = arith.constant 0 : index
      %9 = vector.load %arg5[%c0_8, %c0_9] : memref<1x128xf32, #tpu.memory_space<vmem>>, vector<1x128xf32>
      %10 = vector.shape_cast %9 : vector<1x128xf32> to vector<1x128xf32>
      %11 = vector.broadcast %10 : vector<1x128xf32> to vector<8x128xf32>
      %c0_10 = arith.constant 0 : index
      %c0_11 = arith.constant 0 : index
      %12 = vector.load %arg6[%c0_10, %c0_11] : memref<8x128xf32, #tpu.memory_space<vmem>>, vector<8x128xf32>
      tpu.vector_store %arg6[%c0_10, %c0_11], %11 {strides = array<i32>} : memref<8x128xf32, #tpu.memory_space<vmem>>, vector<8x128xf32>,
    } else {
    }
    %c0 = arith.constant 0 : index
    %c0_1 = arith.constant 0 : index
    %3 = vector.load %arg3[%c0, %c0_1] : memref<8x128xf32, #tpu.memory_space<vmem>>, vector<8x128xf32>
    %c0_2 = arith.constant 0 : index
    %c0_3 = arith.constant 0 : index
    %4 = vector.load %arg4[%c0_2, %c0_3] : memref<128x128xf32, #tpu.memory_space<vmem>>, vector<128x128xf32>
    %c0_4 = arith.constant 0 : index
    %c0_5 = arith.constant 0 : index
    %5 = vector.load %arg6[%c0_4, %c0_5] : memref<8x128xf32, #tpu.memory_space<vmem>>, vector<8x128xf32>
    %cst = arith.constant dense<0.000000e+00> : vector<8x128xf32>
    %6 = tpu.matmul %3, %4, %cst {dimension_numbers = #tpu.dot_dimension_numbers<[1], [1], [0], [0], [0, 0, 1, 0], [], []>, precision = #tpu.contract_precision<fp32>} : vector<8x128xf32>, vector<128x128xf32>, vector<8x128xf32> -> vector<8x128xf32>
    %7 = arith.addf %5, %6 : vector<8x128xf32>
    %c0_6 = arith.constant 0 : index
    %c0_7 = arith.constant 0 : index
    %8 = vector.load %arg6[%c0_6, %c0_7] : memref<8x128xf32, #tpu.memory_space<vmem>>, vector<8x128xf32>
    tpu.vector_store %arg6[%c0_6, %c0_7], %7 {strides = array<i32>} : memref<8x128xf32, #tpu.memory_space<vmem>>, vector<8x128xf32>,
    return
  }
  func.func @transform_0(%arg0: i32, %arg1: i32, %arg2: i32) -> (i32, i32) {
    %c0_i32 = arith.constant 0 : i32
    return %arg0, %arg2 : i32, i32
  }
  func.func @transform_1(%arg0: i32, %arg1: i32, %arg2: i32) -> (i32, i32) {
    %c0_i32 = arith.constant 0 : i32
    return %arg1, %arg2 : i32, i32
  }
  func.func @transform_2(%arg0: i32, %arg1: i32, %arg2: i32) -> (i32, i32) {
    %c0_i32 = arith.constant 0 : i32
    %c0_i32_0 = arith.constant 0 : i32
    return %c0_i32, %arg1 : i32, i32
  }
  func.func @transform_3(%arg0: i32, %arg1: i32, %arg2: i32) -> (i32, i32) {
    %c0_i32 = arith.constant 0 : i32
    return %arg0, %arg1 : i32, i32
  }
}

</mosaic_0001>

<llo_original>
// kernel: tpu_custom_call.1
$region0: #{tpu_custom_call.1}
  #allocation0 [shape = 'u32[]', space=smem, size = 0x4, offset = 0x4, fixed_abs, tag = 'smem constant byte address 0x4 - core index']
  #allocation1 [shape = 'u32[144,128]{1,0:T(1,128)}', space=vmem, size = 0x12000, scoped, tag = 'internal scratch']
  %s0 = inlined_call_operand.hbm [shape: f32[8,128], index: 0, kind: input, shape index: {}]
  %s1 = inlined_call_operand.hbm [shape: f32[128,128], index: 1, kind: input, shape index: {}]
  %s2 = inlined_call_operand.vmem [shape: f32[1,128], index: 2, kind: input, shape index: {}]
  %s3 = inlined_call_operand.hbm [shape: f32[8,128], index: 3, kind: output, shape index: {}]
  %s4 = sld [smem:[#allocation0]]
  $region34: #{tpu_custom_call.1} parent=0
    _
  %s6 = ssub.s32 1, %s4
  %s7 = scalar_select 0, %s6, %s4
  $region1: #{tpu_custom_call.1} parent=0
    #allocation2 [shape = 'u8[4096]{0}', space=vmem, size = 0x1000, scoped, tag = 'input window, operand 0, single buffered']
    #allocation3 [shape = 's32[1]{0}', space=sflag, size = 0x4, scoped, tag = 'scoped memory for tpu_custom_call.1']
    #allocation4 [shape = 's32[1]{0}', space=sflag, size = 0x4, scoped, tag = 'scoped memory for tpu_custom_call.1']
    #allocation5 [shape = 'u8[65536]{0}', space=vmem, size = 0x10000, scoped, tag = 'input window, operand 1, single buffered']
    #allocation6 [shape = 's32[1]{0}', space=sflag, size = 0x4, scoped, tag = 'scoped memory for tpu_custom_call.1']
    #allocation7 [shape = 'u8[4096]{0}', space=vmem, size = 0x1000, scoped, tag = 'output window, operand 0, single buffered']
    %8 = vsyncpa [#allocation3], 0
    %9 = vsyncpa [#allocation6], 0
    %10 = vsyncpa [#allocation4], 0
    // Predicated region
    $region2: #{tpu_custom_call.1} parent=1 // pred_check
      _
    $region3: #{tpu_custom_call.1} parent=1 // pred_check_branch
      %12 = sbr.rel (0) target = $region5
    $region4: #{tpu_custom_call.1} parent=1 // pred_region
      %s14 = ssub.s32 128, 128
      %15 = vsyncadd [#allocation3], %s14
      %s17 = sshll.u32 [#allocation2], 4
      %s18 = int_to_ptr.vmem [resolvable:$true] %s17
      %20 = dma.hbm_to_vmem [thread:$0]  %s0, 128, %s18, [#allocation3]
    $region5: #{tpu_custom_call.1} parent=1 // pred_fallthru
      _
    // Predicated region
    $region6: #{tpu_custom_call.1} parent=1 // pred_check
      _
    $region7: #{tpu_custom_call.1} parent=1 // pred_check_branch
      %22 = sbr.rel (0) target = $region9
    $region8: #{tpu_custom_call.1} parent=1 // pred_region
      %s24 = ssub.s32 2048, 2048
      %25 = vsyncadd [#allocation6], %s24
      %s26 = sshll.u32 [#allocation5], 4
      %s27 = int_to_ptr.vmem [resolvable:$true] %s26
      %32 = dma.hbm_to_vmem [thread:$0]  %s1, 2048, %s27, [#allocation6], 128, 128, 8
    $region9: #{tpu_custom_call.1} parent=1 // pred_fallthru
      _
    // Predicated region
    $region10: #{tpu_custom_call.1} parent=1 // pred_check
      _
    $region11: #{tpu_custom_call.1} parent=1 // pred_check_branch
      %34 = sbr.rel (0) target = $region13
    $region12: #{tpu_custom_call.1} parent=1 // pred_region
      _
    $region13: #{tpu_custom_call.1} parent=1 // pred_fallthru
      _
    // Predicated region
    $region14: #{tpu_custom_call.1} parent=1 // pred_check
      _
    $region15: #{tpu_custom_call.1} parent=1 // pred_check_branch
      %36 = sbr.rel (0) target = $region17
    $region16: #{tpu_custom_call.1} parent=1 // pred_region
      %37 = dma.done [#allocation3], 128
    $region17: #{tpu_custom_call.1} parent=1 // pred_fallthru
      _
    // Predicated region
    $region18: #{tpu_custom_call.1} parent=1 // pred_check
      _
    $region19: #{tpu_custom_call.1} parent=1 // pred_check_branch
      %39 = sbr.rel (0) target = $region21
    $region20: #{tpu_custom_call.1} parent=1 // pred_region
      %40 = dma.done [#allocation6], 2048
    $region21: #{tpu_custom_call.1} parent=1 // pred_fallthru
      _
    %p41 = scmp.eq.s32.totalorder 0, 0
    // Predicated region
    $region22: #{tpu_custom_call.1} parent=1 // pred_check
      %p42 = pneg %p41
    $region23: #{tpu_custom_call.1} parent=1 // pred_check_branch
      %44 = sbr.rel (%p42) target = $region25
    $region24: #{tpu_custom_call.1} parent=1 // pred_region
      %v45 = vld [vmem:[%s2] sm:$0x1]
      %v47 = vlaneseq
      %v48 = vshrl.u32 %v47, 7
      %v49 = vsub.s32 0, %v48
      %v50 = vrot.slane %v45, %v49
      %52 = vst [vmem:[#allocation7] sm:$0xff] %v50
    $region25: #{tpu_custom_call.1} parent=1 // pred_fallthru
      _
    %v53 = vld [vmem:[#allocation2] sm:$0xff]
    %v54 = vld [vmem:[#allocation5] sm:$0xff]
    %v55 = vld [vmem:[#allocation5 + $0x8] sm:$0xff]
    %v56 = vld [vmem:[#allocation5 + $0x10] sm:$0xff]
    %v57 = vld [vmem:[#allocation5 + $0x18] sm:$0xff]
    %v58 = vld [vmem:[#allocation5 + $0x20] sm:$0xff]
    %v59 = vld [vmem:[#allocation5 + $0x28] sm:$0xff]
    %v60 = vld [vmem:[#allocation5 + $0x30] sm:$0xff]
    %v61 = vld [vmem:[#allocation5 + $0x38] sm:$0xff]
    %v62 = vld [vmem:[#allocation5 + $0x40] sm:$0xff]
    %v63 = vld [vmem:[#allocation5 + $0x48] sm:$0xff]
    %v64 = vld [vmem:[#allocation5 + $0x50] sm:$0xff]
    %v65 = vld [vmem:[#allocation5 + $0x58] sm:$0xff]
    %v66 = vld [vmem:[#allocation5 + $0x60] sm:$0xff]
    %v67 = vld [vmem:[#allocation5 + $0x68] sm:$0xff]
    %v68 = vld [vmem:[#allocation5 + $0x70] sm:$0xff]
    %v69 = vld [vmem:[#allocation5 + $0x78] sm:$0xff]
    %v70 = vld [vmem:[#allocation7] sm:$0xff]
    %71 = vmatprep.subr.mxu0 0.0
    %v72 = vand.u32 %v54, 4294901760
    %73 = vmatpush1.xpose.msra.mxu0 %v72
    %74 = vmatprep.subr.mxu0 0.0
    %v75 = vand.u32 %v55, 4294901760
    %76 = vmatpush1.xpose.msra.mxu0 %v75
    %77 = vmatprep.subr.mxu0 0.0
    %v78 = vand.u32 %v56, 4294901760
    %79 = vmatpush1.xpose.msra.mxu0 %v78
    %80 = vmatprep.subr.mxu0 0.0
    %v81 = vand.u32 %v57, 4294901760
    %82 = vmatpush1.xpose.msra.mxu0 %v81
    %83 = vmatprep.subr.mxu0 0.0
    %v84 = vand.u32 %v58, 4294901760
    %85 = vmatpush1.xpose.msra.mxu0 %v84
    %86 = vmatprep.subr.mxu0 0.0
    %v87 = vand.u32 %v59, 4294901760
    %88 = vmatpush1.xpose.msra.mxu0 %v87
    %89 = vmatprep.subr.mxu0 0.0
    %v90 = vand.u32 %v60, 4294901760
    %91 = vmatpush1.xpose.msra.mxu0 %v90
    %92 = vmatprep.subr.mxu0 0.0
    %v93 = vand.u32 %v61, 4294901760
    %94 = vmatpush1.xpose.msra.mxu0 %v93
    %95 = vmatprep.subr.mxu0 0.0
    %v96 = vand.u32 %v62, 4294901760
    %97 = vmatpush1.xpose.msra.mxu0 %v96
    %98 = vmatprep.subr.mxu0 0.0
    %v99 = vand.u32 %v63, 4294901760
    %100 = vmatpush1.xpose.msra.mxu0 %v99
    %101 = vmatprep.subr.mxu0 0.0
    %v102 = vand.u32 %v64, 4294901760
    %103 = vmatpush1.xpose.msra.mxu0 %v102
    %104 = vmatprep.subr.mxu0 0.0
    %v105 = vand.u32 %v65, 4294901760
    %106 = vmatpush1.xpose.msra.mxu0 %v105
    %107 = vmatprep.subr.mxu0 0.0
    %v108 = vand.u32 %v66, 4294901760
    %109 = vmatpush1.xpose.msra.mxu0 %v108
    %110 = vmatprep.subr.mxu0 0.0
    %v111 = vand.u32 %v67, 4294901760
    %112 = vmatpush1.xpose.msra.mxu0 %v111
    %113 = vmatprep.subr.mxu0 0.0
    %v114 = vand.u32 %v68, 4294901760
    %115 = vmatpush1.xpose.msra.mxu0 %v114
    %116 = vmatprep.subr.mxu0 0.0
    %v117 = vand.u32 %v69, 4294901760
    %118 = vmatpush1.xpose.msra.mxu0 %v117
    %119 = vmatprep.subr.mxu0 0.0
    %120 = vmatpush1.xpose.msra.mxu0 0.0
    %121 = vmatprep.subr.mxu0 0.0
    %122 = vmatpush1.xpose.msra.mxu0 0.0
    %123 = vmatprep.subr.mxu0 0.0
    %124 = vmatpush1.xpose.msra.mxu0 0.0
    %125 = vmatprep.subr.mxu0 0.0
    %126 = vmatpush1.xpose.msra.mxu0 0.0
    %127 = vmatprep.subr.mxu0 0.0
    %128 = vmatpush1.xpose.msra.mxu0 0.0
    %129 = vmatprep.subr.mxu0 0.0
    %130 = vmatpush1.xpose.msra.mxu0 0.0
    %131 = vmatprep.subr.mxu0 0.0
    %132 = vmatpush1.xpose.msra.mxu0 0.0
    %133 = vmatprep.subr.mxu0 0.0
    %134 = vmatpush1.xpose.msra.mxu0 0.0
    %135 = vmatprep.subr.mxu0 0.0
    %136 = vmatpush1.xpose.msra.mxu0 0.0
    %137 = vmatprep.subr.mxu0 0.0
    %138 = vmatpush1.xpose.msra.mxu0 0.0
    %139 = vmatprep.subr.mxu0 0.0
    %140 = vmatpush1.xpose.msra.mxu0 0.0
    %141 = vmatprep.subr.mxu0 0.0
    %142 = vmatpush1.xpose.msra.mxu0 0.0
    %143 = vmatprep.subr.mxu0 0.0
    %144 = vmatpush1.xpose.msra.mxu0 0.0
    %145 = vmatprep.subr.mxu0 0.0
    %146 = vmatpush1.xpose.msra.mxu0 0.0
    %147 = vmatprep.subr.mxu0 0.0
    %148 = vmatpush1.xpose.msra.mxu0 0.0
    %149 = vmatprep.subr.mxu0 0.0
    %150 = vmatpush1.xpose.msra.mxu0 0.0
    %151 = vmatprep.mubr.f32.mxu0 0.0
    %v152 = vand.u32 %v53, 4294901760
    %v153 = vsub.f32 %v53, %v152
    %v154 = vand.u32 %v153, 4294901760
    %v155 = vsub.f32 %v153, %v154
    %v156 = vand.u32 %v155, 4294901760
    %157 = vmatmul.mubr.f32.gmra.mrb[0].mxu0 %v156
    %v158 = vpop.f32.mrb[0].mxu0
    %v159 = vadd.f32 0.0, %v158
    %v160 = vpop.f32.mrb[0].mxu0
    %161 = vdwg.mxu0
    %162 = vmatprep.subr.mxu0 0.0
    %v163 = vand.u32 %v54, 4294901760
    %v164 = vsub.f32 %v54, %v163
    %v165 = vand.u32 %v164, 4294901760
    %v166 = vsub.f32 %v164, %v165
    %v167 = vand.u32 %v166, 4294901760
    %168 = vmatpush1.xpose.msra.mxu0 %v167
    %169 = vmatprep.subr.mxu0 0.0
    %v170 = vand.u32 %v55, 4294901760
    %v171 = vsub.f32 %v55, %v170
    %v172 = vand.u32 %v171, 4294901760
    %v173 = vsub.f32 %v171, %v172
    %v174 = vand.u32 %v173, 4294901760
    %175 = vmatpush1.xpose.msra.mxu0 %v174
    %176 = vmatprep.subr.mxu0 0.0
    %v177 = vand.u32 %v56, 4294901760
    %v178 = vsub.f32 %v56, %v177
    %v179 = vand.u32 %v178, 4294901760
    %v180 = vsub.f32 %v178, %v179
    %v181 = vand.u32 %v180, 4294901760
    %182 = vmatpush1.xpose.msra.mxu0 %v181
    %183 = vmatprep.subr.mxu0 0.0
    %v184 = vand.u32 %v57, 4294901760
    %v185 = vsub.f32 %v57, %v184
    %v186 = vand.u32 %v185, 4294901760
    %v187 = vsub.f32 %v185, %v186
    %v188 = vand.u32 %v187, 4294901760
    %189 = vmatpush1.xpose.msra.mxu0 %v188
    %190 = vmatprep.subr.mxu0 0.0
    %v191 = vand.u32 %v58, 4294901760
    %v192 = vsub.f32 %v58, %v191
    %v193 = vand.u32 %v192, 4294901760
    %v194 = vsub.f32 %v192, %v193
    %v195 = vand.u32 %v194, 4294901760
    %196 = vmatpush1.xpose.msra.mxu0 %v195
    %197 = vmatprep.subr.mxu0 0.0
    %v198 = vand.u32 %v59, 4294901760
    %v199 = vsub.f32 %v59, %v198
    %v200 = vand.u32 %v199, 4294901760
    %v201 = vsub.f32 %v199, %v200
    %v202 = vand.u32 %v201, 4294901760
    %203 = vmatpush1.xpose.msra.mxu0 %v202
    %204 = vmatprep.subr.mxu0 0.0
    %v205 = vand.u32 %v60, 4294901760
    %v206 = vsub.f32 %v60, %v205
    %v207 = vand.u32 %v206, 4294901760
    %v208 = vsub.f32 %v206, %v207
    %v209 = vand.u32 %v208, 4294901760
    %210 = vmatpush1.xpose.msra.mxu0 %v209
    %211 = vmatprep.subr.mxu0 0.0
    %v212 = vand.u32 %v61, 4294901760
    %v213 = vsub.f32 %v61, %v212
    %v214 = vand.u32 %v213, 4294901760
    %v215 = vsub.f32 %v213, %v214
    %v216 = vand.u32 %v215, 4294901760
    %217 = vmatpush1.xpose.msra.mxu0 %v216
    %218 = vmatprep.subr.mxu0 0.0
    %v219 = vand.u32 %v62, 4294901760
    %v220 = vsub.f32 %v62, %v219
    %v221 = vand.u32 %v220, 4294901760
    %v222 = vsub.f32 %v220, %v221
    %v223 = vand.u32 %v222, 4294901760
    %224 = vmatpush1.xpose.msra.mxu0 %v223
    %225 = vmatprep.subr.mxu0 0.0
    %v226 = vand.u32 %v63, 4294901760
    %v227 = vsub.f32 %v63, %v226
    %v228 = vand.u32 %v227, 4294901760
    %v229 = vsub.f32 %v227, %v228
    %v230 = vand.u32 %v229, 4294901760
    %231 = vmatpush1.xpose.msra.mxu0 %v230
    %232 = vmatprep.subr.mxu0 0.0
    %v233 = vand.u32 %v64, 4294901760
    %v234 = vsub.f32 %v64, %v233
    %v235 = vand.u32 %v234, 4294901760
    %v236 = vsub.f32 %v234, %v235
    %v237 = vand.u32 %v236, 4294901760
    %238 = vmatpush1.xpose.msra.mxu0 %v237
    %239 = vmatprep.subr.mxu0 0.0
    %v240 = vand.u32 %v65, 4294901760
    %v241 = vsub.f32 %v65, %v240
    %v242 = vand.u32 %v241, 4294901760
    %v243 = vsub.f32 %v241, %v242
    %v244 = vand.u32 %v243, 4294901760
    %245 = vmatpush1.xpose.msra.mxu0 %v244
    %246 = vmatprep.subr.mxu0 0.0
    %v247 = vand.u32 %v66, 4294901760
    %v248 = vsub.f32 %v66, %v247
    %v249 = vand.u32 %v248, 4294901760
    %v250 = vsub.f32 %v248, %v249
    %v251 = vand.u32 %v250, 4294901760
    %252 = vmatpush1.xpose.msra.mxu0 %v251
    %253 = vmatprep.subr.mxu0 0.0
    %v254 = vand.u32 %v67, 4294901760
    %v255 = vsub.f32 %v67, %v254
    %v256 = vand.u32 %v255, 4294901760
    %v257 = vsub.f32 %v255, %v256
    %v258 = vand.u32 %v257, 4294901760
    %259 = vmatpush1.xpose.msra.mxu0 %v258
    %260 = vmatprep.subr.mxu0 0.0
    %v261 = vand.u32 %v68, 4294901760
    %v262 = vsub.f32 %v68, %v261
    %v263 = vand.u32 %v262, 4294901760
    %v264 = vsub.f32 %v262, %v263
    %v265 = vand.u32 %v264, 4294901760
    %266 = vmatpush1.xpose.msra.mxu0 %v265
    %267 = vmatprep.subr.mxu0 0.0
    %v268 = vand.u32 %v69, 4294901760
    %v269 = vsub.f32 %v69, %v268
    %v270 = vand.u32 %v269, 4294901760
    %v271 = vsub.f32 %v269, %v270
    %v272 = vand.u32 %v271, 4294901760
    %273 = vmatpush1.xpose.msra.mxu0 %v272
    %274 = vmatprep.subr.mxu0 0.0
    %275 = vmatpush1.xpose.msra.mxu0 0.0
    %276 = vmatprep.subr.mxu0 0.0
    %277 = vmatpush1.xpose.msra.mxu0 0.0
    %278 = vmatprep.subr.mxu0 0.0
    %279 = vmatpush1.xpose.msra.mxu0 0.0
    %280 = vmatprep.subr.mxu0 0.0
    %281 = vmatpush1.xpose.msra.mxu0 0.0
    %282 = vmatprep.subr.mxu0 0.0
    %283 = vmatpush1.xpose.msra.mxu0 0.0
    %284 = vmatprep.subr.mxu0 0.0
    %285 = vmatpush1.xpose.msra.mxu0 0.0
    %286 = vmatprep.subr.mxu0 0.0
    %287 = vmatpush1.xpose.msra.mxu0 0.0
    %288 = vmatprep.subr.mxu0 0.0
    %289 = vmatpush1.xpose.msra.mxu0 0.0
    %290 = vmatprep.subr.mxu0 0.0
    %291 = vmatpush1.xpose.msra.mxu0 0.0
    %292 = vmatprep.subr.mxu0 0.0
    %293 = vmatpush1.xpose.msra.mxu0 0.0
    %294 = vmatprep.subr.mxu0 0.0
    %295 = vmatpush1.xpose.msra.mxu0 0.0
    %296 = vmatprep.subr.mxu0 0.0
    %297 = vmatpush1.xpose.msra.mxu0 0.0
    %298 = vmatprep.subr.mxu0 0.0
    %299 = vmatpush1.xpose.msra.mxu0 0.0
    %300 = vmatprep.subr.mxu0 0.0
    %301 = vmatpush1.xpose.msra.mxu0 0.0
    %302 = vmatprep.subr.mxu0 0.0
    %303 = vmatpush1.xpose.msra.mxu0 0.0
    %304 = vmatprep.subr.mxu0 0.0
    %305 = vmatpush1.xpose.msra.mxu0 0.0
    %306 = vmatprep.mubr.f32.mxu0 0.0
    %v307 = vand.u32 %v53, 4294901760
    %308 = vmatmul.mubr.f32.gmra.mrb[0].mxu0 %v307
    %v309 = vpop.f32.mrb[0].mxu0
    %v310 = vadd.f32 %v159, %v309
    %v311 = vpop.f32.mrb[0].mxu0
    %312 = vdwg.mxu0
    %313 = vmatprep.subr.mxu0 0.0
    %v314 = vand.u32 %v54, 4294901760
    %v315 = vsub.f32 %v54, %v314
    %316 = vmatpush1.xpose.msra.mxu0 %v315
    %317 = vmatprep.subr.mxu0 0.0
    %v318 = vand.u32 %v55, 4294901760
    %v319 = vsub.f32 %v55, %v318
    %320 = vmatpush1.xpose.msra.mxu0 %v319
    %321 = vmatprep.subr.mxu0 0.0
    %v322 = vand.u32 %v56, 4294901760
    %v323 = vsub.f32 %v56, %v322
    %324 = vmatpush1.xpose.msra.mxu0 %v323
    %325 = vmatprep.subr.mxu0 0.0
    %v326 = vand.u32 %v57, 4294901760
    %v327 = vsub.f32 %v57, %v326
    %328 = vmatpush1.xpose.msra.mxu0 %v327
    %329 = vmatprep.subr.mxu0 0.0
    %v330 = vand.u32 %v58, 4294901760
    %v331 = vsub.f32 %v58, %v330
    %332 = vmatpush1.xpose.msra.mxu0 %v331
    %333 = vmatprep.subr.mxu0 0.0
    %v334 = vand.u32 %v59, 4294901760
    %v335 = vsub.f32 %v59, %v334
    %336 = vmatpush1.xpose.msra.mxu0 %v335
    %337 = vmatprep.subr.mxu0 0.0
    %v338 = vand.u32 %v60, 4294901760
    %v339 = vsub.f32 %v60, %v338
    %340 = vmatpush1.xpose.msra.mxu0 %v339
    %341 = vmatprep.subr.mxu0 0.0
    %v342 = vand.u32 %v61, 4294901760
    %v343 = vsub.f32 %v61, %v342
    %344 = vmatpush1.xpose.msra.mxu0 %v343
    %345 = vmatprep.subr.mxu0 0.0
    %v346 = vand.u32 %v62, 4294901760
    %v347 = vsub.f32 %v62, %v346
    %348 = vmatpush1.xpose.msra.mxu0 %v347
    %349 = vmatprep.subr.mxu0 0.0
    %v350 = vand.u32 %v63, 4294901760
    %v351 = vsub.f32 %v63, %v350
    %352 = vmatpush1.xpose.msra.mxu0 %v351
    %353 = vmatprep.subr.mxu0 0.0
    %v354 = vand.u32 %v64, 4294901760
    %v355 = vsub.f32 %v64, %v354
    %356 = vmatpush1.xpose.msra.mxu0 %v355
    %357 = vmatprep.subr.mxu0 0.0
    %v358 = vand.u32 %v65, 4294901760
    %v359 = vsub.f32 %v65, %v358
    %360 = vmatpush1.xpose.msra.mxu0 %v359
    %361 = vmatprep.subr.mxu0 0.0
    %v362 = vand.u32 %v66, 4294901760
    %v363 = vsub.f32 %v66, %v362
    %364 = vmatpush1.xpose.msra.mxu0 %v363
    %365 = vmatprep.subr.mxu0 0.0
    %v366 = vand.u32 %v67, 4294901760
    %v367 = vsub.f32 %v67, %v366
    %368 = vmatpush1.xpose.msra.mxu0 %v367
    %369 = vmatprep.subr.mxu0 0.0
    %v370 = vand.u32 %v68, 4294901760
    %v371 = vsub.f32 %v68, %v370
    %372 = vmatpush1.xpose.msra.mxu0 %v371
    %373 = vmatprep.subr.mxu0 0.0
    %v374 = vand.u32 %v69, 4294901760
    %v375 = vsub.f32 %v69, %v374
    %376 = vmatpush1.xpose.msra.mxu0 %v375
    %377 = vmatprep.subr.mxu0 0.0
    %378 = vmatpush1.xpose.msra.mxu0 0.0
    %379 = vmatprep.subr.mxu0 0.0
    %380 = vmatpush1.xpose.msra.mxu0 0.0
    %381 = vmatprep.subr.mxu0 0.0
    %382 = vmatpush1.xpose.msra.mxu0 0.0
    %383 = vmatprep.subr.mxu0 0.0
    %384 = vmatpush1.xpose.msra.mxu0 0.0
    %385 = vmatprep.subr.mxu0 0.0
    %386 = vmatpush1.xpose.msra.mxu0 0.0
    %387 = vmatprep.subr.mxu0 0.0
    %388 = vmatpush1.xpose.msra.mxu0 0.0
    %389 = vmatprep.subr.mxu0 0.0
    %390 = vmatpush1.xpose.msra.mxu0 0.0
    %391 = vmatprep.subr.mxu0 0.0
    %392 = vmatpush1.xpose.msra.mxu0 0.0
    %393 = vmatprep.subr.mxu0 0.0
    %394 = vmatpush1.xpose.msra.mxu0 0.0
    %395 = vmatprep.subr.mxu0 0.0
    %396 = vmatpush1.xpose.msra.mxu0 0.0
    %397 = vmatprep.subr.mxu0 0.0
    %398 = vmatpush1.xpose.msra.mxu0 0.0
    %399 = vmatprep.subr.mxu0 0.0
    %400 = vmatpush1.xpose.msra.mxu0 0.0
    %401 = vmatprep.subr.mxu0 0.0
    %402 = vmatpush1.xpose.msra.mxu0 0.0
    %403 = vmatprep.subr.mxu0 0.0
    %404 = vmatpush1.xpose.msra.mxu0 0.0
    %405 = vmatprep.subr.mxu0 0.0
    %406 = vmatpush1.xpose.msra.mxu0 0.0
    %407 = vmatprep.subr.mxu0 0.0
    %408 = vmatpush1.xpose.msra.mxu0 0.0
    %409 = vmatprep.mubr.f32.mxu0 0.0
    %v410 = vand.u32 %v53, 4294901760
    %v411 = vsub.f32 %v53, %v410
    %412 = vmatmul.mubr.f32.gmra.mrb[0].mxu0 %v411
    %v413 = vpop.f32.mrb[0].mxu0
    %v414 = vadd.f32 %v310, %v413
    %v415 = vpop.f32.mrb[0].mxu0
    %416 = vdwg.mxu0
    %417 = vmatprep.subr.mxu0 0.0
    %v418 = vand.u32 %v54, 4294901760
    %419 = vmatpush1.xpose.msra.mxu0 %v418
    %420 = vmatprep.subr.mxu0 0.0
    %v421 = vand.u32 %v55, 4294901760
    %422 = vmatpush1.xpose.msra.mxu0 %v421
    %423 = vmatprep.subr.mxu0 0.0
    %v424 = vand.u32 %v56, 4294901760
    %425 = vmatpush1.xpose.msra.mxu0 %v424
    %426 = vmatprep.subr.mxu0 0.0
    %v427 = vand.u32 %v57, 4294901760
    %428 = vmatpush1.xpose.msra.mxu0 %v427
    %429 = vmatprep.subr.mxu0 0.0
    %v430 = vand.u32 %v58, 4294901760
    %431 = vmatpush1.xpose.msra.mxu0 %v430
    %432 = vmatprep.subr.mxu0 0.0
    %v433 = vand.u32 %v59, 4294901760
    %434 = vmatpush1.xpose.msra.mxu0 %v433
    %435 = vmatprep.subr.mxu0 0.0
    %v436 = vand.u32 %v60, 4294901760
    %437 = vmatpush1.xpose.msra.mxu0 %v436
    %438 = vmatprep.subr.mxu0 0.0
    %v439 = vand.u32 %v61, 4294901760
    %440 = vmatpush1.xpose.msra.mxu0 %v439
    %441 = vmatprep.subr.mxu0 0.0
    %v442 = vand.u32 %v62, 4294901760
    %443 = vmatpush1.xpose.msra.mxu0 %v442
    %444 = vmatprep.subr.mxu0 0.0
    %v445 = vand.u32 %v63, 4294901760
    %446 = vmatpush1.xpose.msra.mxu0 %v445
    %447 = vmatprep.subr.mxu0 0.0
    %v448 = vand.u32 %v64, 4294901760
    %449 = vmatpush1.xpose.msra.mxu0 %v448
    %450 = vmatprep.subr.mxu0 0.0
    %v451 = vand.u32 %v65, 4294901760
    %452 = vmatpush1.xpose.msra.mxu0 %v451
    %453 = vmatprep.subr.mxu0 0.0
    %v454 = vand.u32 %v66, 4294901760
    %455 = vmatpush1.xpose.msra.mxu0 %v454
    %456 = vmatprep.subr.mxu0 0.0
    %v457 = vand.u32 %v67, 4294901760
    %458 = vmatpush1.xpose.msra.mxu0 %v457
    %459 = vmatprep.subr.mxu0 0.0
    %v460 = vand.u32 %v68, 4294901760
    %461 = vmatpush1.xpose.msra.mxu0 %v460
    %462 = vmatprep.subr.mxu0 0.0
    %v463 = vand.u32 %v69, 4294901760
    %464 = vmatpush1.xpose.msra.mxu0 %v463
    %465 = vmatprep.subr.mxu0 0.0
    %466 = vmatpush1.xpose.msra.mxu0 0.0
    %467 = vmatprep.subr.mxu0 0.0
    %468 = vmatpush1.xpose.msra.mxu0 0.0
    %469 = vmatprep.subr.mxu0 0.0
    %470 = vmatpush1.xpose.msra.mxu0 0.0
    %471 = vmatprep.subr.mxu0 0.0
    %472 = vmatpush1.xpose.msra.mxu0 0.0
    %473 = vmatprep.subr.mxu0 0.0
    %474 = vmatpush1.xpose.msra.mxu0 0.0
    %475 = vmatprep.subr.mxu0 0.0
    %476 = vmatpush1.xpose.msra.mxu0 0.0
    %477 = vmatprep.subr.mxu0 0.0
    %478 = vmatpush1.xpose.msra.mxu0 0.0
    %479 = vmatprep.subr.mxu0 0.0
    %480 = vmatpush1.xpose.msra.mxu0 0.0
    %481 = vmatprep.subr.mxu0 0.0
    %482 = vmatpush1.xpose.msra.mxu0 0.0
    %483 = vmatprep.subr.mxu0 0.0
    %484 = vmatpush1.xpose.msra.mxu0 0.0
    %485 = vmatprep.subr.mxu0 0.0
    %486 = vmatpush1.xpose.msra.mxu0 0.0
    %487 = vmatprep.subr.mxu0 0.0
    %488 = vmatpush1.xpose.msra.mxu0 0.0
    %489 = vmatprep.subr.mxu0 0.0
    %490 = vmatpush1.xpose.msra.mxu0 0.0
    %491 = vmatprep.subr.mxu0 0.0
    %492 = vmatpush1.xpose.msra.mxu0 0.0
    %493 = vmatprep.subr.mxu0 0.0
    %494 = vmatpush1.xpose.msra.mxu0 0.0
    %495 = vmatprep.subr.mxu0 0.0
    %496 = vmatpush1.xpose.msra.mxu0 0.0
    %497 = vmatprep.mubr.f32.mxu0 0.0
    %v498 = vand.u32 %v53, 4294901760
    %v499 = vsub.f32 %v53, %v498
    %v500 = vand.u32 %v499, 4294901760
    %501 = vmatmul.mubr.f32.gmra.mrb[0].mxu0 %v500
    %v502 = vpop.f32.mrb[0].mxu0
    %v503 = vadd.f32 %v414, %v502
    %v504 = vpop.f32.mrb[0].mxu0
    %505 = vdwg.mxu0
    %506 = vmatprep.subr.mxu0 0.0
    %v507 = vand.u32 %v54, 4294901760
    %v508 = vsub.f32 %v54, %v507
    %v509 = vand.u32 %v508, 4294901760
    %510 = vmatpush1.xpose.msra.mxu0 %v509
    %511 = vmatprep.subr.mxu0 0.0
    %v512 = vand.u32 %v55, 4294901760
    %v513 = vsub.f32 %v55, %v512
    %v514 = vand.u32 %v513, 4294901760
    %515 = vmatpush1.xpose.msra.mxu0 %v514
    %516 = vmatprep.subr.mxu0 0.0
    %v517 = vand.u32 %v56, 4294901760
    %v518 = vsub.f32 %v56, %v517
    %v519 = vand.u32 %v518, 4294901760
    %520 = vmatpush1.xpose.msra.mxu0 %v519
    %521 = vmatprep.subr.mxu0 0.0
    %v522 = vand.u32 %v57, 4294901760
    %v523 = vsub.f32 %v57, %v522
    %v524 = vand.u32 %v523, 4294901760
    %525 = vmatpush1.xpose.msra.mxu0 %v524
    %526 = vmatprep.subr.mxu0 0.0
    %v527 = vand.u32 %v58, 4294901760
    %v528 = vsub.f32 %v58, %v527
    %v529 = vand.u32 %v528, 4294901760
    %530 = vmatpush1.xpose.msra.mxu0 %v529
    %531 = vmatprep.subr.mxu0 0.0
    %v532 = vand.u32 %v59, 4294901760
    %v533 = vsub.f32 %v59, %v532
    %v534 = vand.u32 %v533, 4294901760
    %535 = vmatpush1.xpose.msra.mxu0 %v534
    %536 = vmatprep.subr.mxu0 0.0
    %v537 = vand.u32 %v60, 4294901760
    %v538 = vsub.f32 %v60, %v537
    %v539 = vand.u32 %v538, 4294901760
    %540 = vmatpush1.xpose.msra.mxu0 %v539
    %541 = vmatprep.subr.mxu0 0.0
    %v542 = vand.u32 %v61, 4294901760
    %v543 = vsub.f32 %v61, %v542
    %v544 = vand.u32 %v543, 4294901760
    %545 = vmatpush1.xpose.msra.mxu0 %v544
    %546 = vmatprep.subr.mxu0 0.0
    %v547 = vand.u32 %v62, 4294901760
    %v548 = vsub.f32 %v62, %v547
    %v549 = vand.u32 %v548, 4294901760
    %550 = vmatpush1.xpose.msra.mxu0 %v549
    %551 = vmatprep.subr.mxu0 0.0
    %v552 = vand.u32 %v63, 4294901760
    %v553 = vsub.f32 %v63, %v552
    %v554 = vand.u32 %v553, 4294901760
    %555 = vmatpush1.xpose.msra.mxu0 %v554
    %556 = vmatprep.subr.mxu0 0.0
    %v557 = vand.u32 %v64, 4294901760
    %v558 = vsub.f32 %v64, %v557
    %v559 = vand.u32 %v558, 4294901760
    %560 = vmatpush1.xpose.msra.mxu0 %v559
    %561 = vmatprep.subr.mxu0 0.0
    %v562 = vand.u32 %v65, 4294901760
    %v563 = vsub.f32 %v65, %v562
    %v564 = vand.u32 %v563, 4294901760
    %565 = vmatpush1.xpose.msra.mxu0 %v564
    %566 = vmatprep.subr.mxu0 0.0
    %v567 = vand.u32 %v66, 4294901760
    %v568 = vsub.f32 %v66, %v567
    %v569 = vand.u32 %v568, 4294901760
    %570 = vmatpush1.xpose.msra.mxu0 %v569
    %571 = vmatprep.subr.mxu0 0.0
    %v572 = vand.u32 %v67, 4294901760
    %v573 = vsub.f32 %v67, %v572
    %v574 = vand.u32 %v573, 4294901760
    %575 = vmatpush1.xpose.msra.mxu0 %v574
    %576 = vmatprep.subr.mxu0 0.0
    %v577 = vand.u32 %v68, 4294901760
    %v578 = vsub.f32 %v68, %v577
    %v579 = vand.u32 %v578, 4294901760
    %580 = vmatpush1.xpose.msra.mxu0 %v579
    %581 = vmatprep.subr.mxu0 0.0
    %v582 = vand.u32 %v69, 4294901760
    %v583 = vsub.f32 %v69, %v582
    %v584 = vand.u32 %v583, 4294901760
    %585 = vmatpush1.xpose.msra.mxu0 %v584
    %586 = vmatprep.subr.mxu0 0.0
    %587 = vmatpush1.xpose.msra.mxu0 0.0
    %588 = vmatprep.subr.mxu0 0.0
    %589 = vmatpush1.xpose.msra.mxu0 0.0
    %590 = vmatprep.subr.mxu0 0.0
    %591 = vmatpush1.xpose.msra.mxu0 0.0
    %592 = vmatprep.subr.mxu0 0.0
    %593 = vmatpush1.xpose.msra.mxu0 0.0
    %594 = vmatprep.subr.mxu0 0.0
    %595 = vmatpush1.xpose.msra.mxu0 0.0
    %596 = vmatprep.subr.mxu0 0.0
    %597 = vmatpush1.xpose.msra.mxu0 0.0
    %598 = vmatprep.subr.mxu0 0.0
    %599 = vmatpush1.xpose.msra.mxu0 0.0
    %600 = vmatprep.subr.mxu0 0.0
    %601 = vmatpush1.xpose.msra.mxu0 0.0
    %602 = vmatprep.subr.mxu0 0.0
    %603 = vmatpush1.xpose.msra.mxu0 0.0
    %604 = vmatprep.subr.mxu0 0.0
    %605 = vmatpush1.xpose.msra.mxu0 0.0
    %606 = vmatprep.subr.mxu0 0.0
    %607 = vmatpush1.xpose.msra.mxu0 0.0
    %608 = vmatprep.subr.mxu0 0.0
    %609 = vmatpush1.xpose.msra.mxu0 0.0
    %610 = vmatprep.subr.mxu0 0.0
    %611 = vmatpush1.xpose.msra.mxu0 0.0
    %612 = vmatprep.subr.mxu0 0.0
    %613 = vmatpush1.xpose.msra.mxu0 0.0
    %614 = vmatprep.subr.mxu0 0.0
    %615 = vmatpush1.xpose.msra.mxu0 0.0
    %616 = vmatprep.subr.mxu0 0.0
    %617 = vmatpush1.xpose.msra.mxu0 0.0
    %618 = vmatprep.mubr.f32.mxu0 0.0
    %v619 = vand.u32 %v53, 4294901760
    %620 = vmatmul.mubr.f32.gmra.mrb[0].mxu0 %v619
    %v621 = vpop.f32.mrb[0].mxu0
    %v622 = vadd.f32 %v503, %v621
    %v623 = vpop.f32.mrb[0].mxu0
    %624 = vdwg.mxu0
    %625 = vmatprep.subr.mxu0 0.0
    %v626 = vand.u32 %v54, 4294901760
    %627 = vmatpush1.xpose.msra.mxu0 %v626
    %628 = vmatprep.subr.mxu0 0.0
    %v629 = vand.u32 %v55, 4294901760
    %630 = vmatpush1.xpose.msra.mxu0 %v629
    %631 = vmatprep.subr.mxu0 0.0
    %v632 = vand.u32 %v56, 4294901760
    %633 = vmatpush1.xpose.msra.mxu0 %v632
    %634 = vmatprep.subr.mxu0 0.0
    %v635 = vand.u32 %v57, 4294901760
    %636 = vmatpush1.xpose.msra.mxu0 %v635
    %637 = vmatprep.subr.mxu0 0.0
    %v638 = vand.u32 %v58, 4294901760
    %639 = vmatpush1.xpose.msra.mxu0 %v638
    %640 = vmatprep.subr.mxu0 0.0
    %v641 = vand.u32 %v59, 4294901760
    %642 = vmatpush1.xpose.msra.mxu0 %v641
    %643 = vmatprep.subr.mxu0 0.0
    %v644 = vand.u32 %v60, 4294901760
    %645 = vmatpush1.xpose.msra.mxu0 %v644
    %646 = vmatprep.subr.mxu0 0.0
    %v647 = vand.u32 %v61, 4294901760
    %648 = vmatpush1.xpose.msra.mxu0 %v647
    %649 = vmatprep.subr.mxu0 0.0
    %v650 = vand.u32 %v62, 4294901760
    %651 = vmatpush1.xpose.msra.mxu0 %v650
    %652 = vmatprep.subr.mxu0 0.0
    %v653 = vand.u32 %v63, 4294901760
    %654 = vmatpush1.xpose.msra.mxu0 %v653
    %655 = vmatprep.subr.mxu0 0.0
    %v656 = vand.u32 %v64, 4294901760
    %657 = vmatpush1.xpose.msra.mxu0 %v656
    %658 = vmatprep.subr.mxu0 0.0
    %v659 = vand.u32 %v65, 4294901760
    %660 = vmatpush1.xpose.msra.mxu0 %v659
    %661 = vmatprep.subr.mxu0 0.0
    %v662 = vand.u32 %v66, 4294901760
    %663 = vmatpush1.xpose.msra.mxu0 %v662
    %664 = vmatprep.subr.mxu0 0.0
    %v665 = vand.u32 %v67, 4294901760
    %666 = vmatpush1.xpose.msra.mxu0 %v665
    %667 = vmatprep.subr.mxu0 0.0
    %v668 = vand.u32 %v68, 4294901760
    %669 = vmatpush1.xpose.msra.mxu0 %v668
    %670 = vmatprep.subr.mxu0 0.0
    %v671 = vand.u32 %v69, 4294901760
    %672 = vmatpush1.xpose.msra.mxu0 %v671
    %673 = vmatprep.subr.mxu0 0.0
    %674 = vmatpush1.xpose.msra.mxu0 0.0
    %675 = vmatprep.subr.mxu0 0.0
    %676 = vmatpush1.xpose.msra.mxu0 0.0
    %677 = vmatprep.subr.mxu0 0.0
    %678 = vmatpush1.xpose.msra.mxu0 0.0
    %679 = vmatprep.subr.mxu0 0.0
    %680 = vmatpush1.xpose.msra.mxu0 0.0
    %681 = vmatprep.subr.mxu0 0.0
    %682 = vmatpush1.xpose.msra.mxu0 0.0
    %683 = vmatprep.subr.mxu0 0.0
    %684 = vmatpush1.xpose.msra.mxu0 0.0
    %685 = vmatprep.subr.mxu0 0.0
    %686 = vmatpush1.xpose.msra.mxu0 0.0
    %687 = vmatprep.subr.mxu0 0.0
    %688 = vmatpush1.xpose.msra.mxu0 0.0
    %689 = vmatprep.subr.mxu0 0.0
    %690 = vmatpush1.xpose.msra.mxu0 0.0
    %691 = vmatprep.subr.mxu0 0.0
    %692 = vmatpush1.xpose.msra.mxu0 0.0
    %693 = vmatprep.subr.mxu0 0.0
    %694 = vmatpush1.xpose.msra.mxu0 0.0
    %695 = vmatprep.subr.mxu0 0.0
    %696 = vmatpush1.xpose.msra.mxu0 0.0
    %697 = vmatprep.subr.mxu0 0.0
    %698 = vmatpush1.xpose.msra.mxu0 0.0
    %699 = vmatprep.subr.mxu0 0.0
    %700 = vmatpush1.xpose.msra.mxu0 0.0
    %701 = vmatprep.subr.mxu0 0.0
    %702 = vmatpush1.xpose.msra.mxu0 0.0
    %703 = vmatprep.subr.mxu0 0.0
    %704 = vmatpush1.xpose.msra.mxu0 0.0
    %705 = vmatprep.mubr.f32.mxu0 0.0
    %v706 = vand.u32 %v53, 4294901760
    %707 = vmatmul.mubr.f32.gmra.mrb[0].mxu0 %v706
    %v708 = vpop.f32.mrb[0].mxu0
    %v709 = vadd.f32 %v622, %v708
    %v710 = vpop.f32.mrb[0].mxu0
    %711 = vdwg.mxu0
    %v712 = vadd.f32 %v70, %v709
    %713 = vst [vmem:[#allocation7] sm:$0xff] %v712
    // Predicated region
    $region26: #{tpu_custom_call.1} parent=1 // pred_check
      _
    $region27: #{tpu_custom_call.1} parent=1 // pred_check_branch
      %715 = sbr.rel (0) target = $region29
    $region28: #{tpu_custom_call.1} parent=1 // pred_region
      %s717 = ssub.s32 128, 128
      %718 = vsyncadd [#allocation4], %s717
      %s720 = sshll.u32 [#allocation7], 4
      %s721 = int_to_ptr.vmem [resolvable:$true] %s720
      %723 = dma.vmem_to_hbm [thread:$0]  %s721, 128, %s3, [#allocation4]
    $region29: #{tpu_custom_call.1} parent=1 // pred_fallthru
      _
    // Predicated region
    $region30: #{tpu_custom_call.1} parent=1 // pred_check
      _
    $region31: #{tpu_custom_call.1} parent=1 // pred_check_branch
      %725 = sbr.rel (0) target = $region33
    $region32: #{tpu_custom_call.1} parent=1 // pred_region
      %726 = dma.done [#allocation4], 128
    $region33: #{tpu_custom_call.1} parent=1 // pred_fallthru
      _
    %727 = vsyncpa [#allocation3], 1
    %728 = vsyncpa [#allocation6], 1
    %729 = vsyncpa [#allocation4], 1

</llo_original>
